<compile_context>
chip_gen: v6e
topology: v6e:2x2x1
jax: 0.10.0
libtpu: 0.0.40
codegen_flags: <defaults>
</compile_context>

<pallas_src>
import functools

import jax
import jax.numpy as jnp
from jax.experimental import pallas as pl
from jax.experimental.pallas import tpu as pltpu


OUT_PAD = 128  # lane-dense output width; the real Q-value is column 0


def qnn_kernel(x_ref, y_ref, w1x_ref, w1y_ref, b1_ref,
               w2_ref, b2_ref, w3_ref, b3_ref, wo_ref, bo_ref, out_ref):
    """One batch tile: 3x (matmul + bias + relu) then final linear (128-padded)."""
    bf16 = jnp.bfloat16

    # Layer 1: cat((x, y), 1) @ W1 == x @ W1[:obs] + y @ W1[obs:]
    h = jnp.dot(x_ref[...].astype(bf16), w1x_ref[...],
                preferred_element_type=jnp.float32)
    h += jnp.dot(y_ref[...].astype(bf16), w1y_ref[...],
                 preferred_element_type=jnp.float32)
    h = jnp.maximum(h + b1_ref[...], 0.0)          # bias + relu in f32

    h = jnp.dot(h.astype(bf16), w2_ref[...], preferred_element_type=jnp.float32)
    h = jnp.maximum(h + b2_ref[...], 0.0)

    h = jnp.dot(h.astype(bf16), w3_ref[...], preferred_element_type=jnp.float32)
    h = jnp.maximum(h + b3_ref[...], 0.0)

    # Output layer kept fully f32 (tiny +/-0.003 weights).
    out = jnp.dot(h, wo_ref[...], preferred_element_type=jnp.float32)
    out_ref[...] = (out + bo_ref[...]).astype(out_ref.dtype)


def _round_up(n, m):
    return ((n + m - 1) // m) * m


@functools.partial(jax.jit, static_argnames=("block_b",))
def qnn_forward(x, y, params, *, block_b=1024):
    """x: (B, obs_size), y: (B, num_actions) -> (B, 1) float32.

    block_b: batch-tile size. 1024 is a good default for v5e/v6e and still
    comfortably fits v7x's smaller VMEM (weights are tiny, activations ~5 MB
    at TB=1024); raise it (with vmem_limit_bytes) for very large batches.
    """
    (w1, b1), (w2, b2), (w3, b3), (wo, bo) = params
    B, obs = x.shape
    act = y.shape[1]
    h3 = w3.shape[1]

    # Batch tile (multiple of 8 sublanes); pad B up to a multiple of TB.
    TB = min(block_b, _round_up(B, 8))
    Bp = _round_up(B, TB)
    if Bp != B:
        x = jnp.pad(x, ((0, Bp - B), (0, 0)))
        y = jnp.pad(y, ((0, Bp - B), (0, 0)))

    bf16 = jnp.bfloat16
    # Split layer-1 weight so the concat is fused into the kernel.
    w1x = w1[:obs].astype(bf16)
    w1y = w1[obs:].astype(bf16)
    # Zero-pad the 1-wide output layer to 128 lanes (unmasked vst stores).
    wo_p = jnp.zeros((h3, OUT_PAD), jnp.float32).at[:, :1].set(wo)
    bo_p = jnp.zeros((1, OUT_PAD), jnp.float32).at[:, :1].set(bo)

    args = (x, y, w1x, w1y, b1, w2.astype(bf16), b2, w3.astype(bf16), b3,
            wo_p, bo_p)

    def row_spec(feat):
        return pl.BlockSpec((TB, feat), lambda i: (i, 0))

    def resident_spec(a):                       # whole array, same block each step
        return pl.BlockSpec(a.shape, lambda i: (0, 0))

    in_specs = [row_spec(obs), row_spec(act)] + [resident_spec(a) for a in args[2:]]

    out = pl.pallas_call(
        qnn_kernel,
        out_shape=jax.ShapeDtypeStruct((Bp, OUT_PAD), jnp.float32),
        grid=(Bp // TB,),
        in_specs=in_specs,
        out_specs=pl.BlockSpec((TB, OUT_PAD), lambda i: (i, 0)),
        compiler_params=pltpu.CompilerParams(
            dimension_semantics=("parallel",)),
    )(*args)

    return out[:B, :1]


def init_linear(key, fan_in, fan_out, w_range=None):
    """Mimics nn.Linear default init (uniform +/- 1/sqrt(fan_in)).

    Weight is returned transposed: (fan_in, fan_out); bias is (1, fan_out)."""
    kw, kb = jax.random.split(key)
    bound = 1.0 / jnp.sqrt(jnp.float32(fan_in))
    rng = bound if w_range is None else w_range
    w = jax.random.uniform(kw, (fan_in, fan_out), jnp.float32,
                           minval=-rng, maxval=rng)
    b = jax.random.uniform(kb, (1, fan_out), jnp.float32,
                           minval=-bound, maxval=bound)
    return w, b


def reference_forward(x, y, params):
    """Pure-JAX f32 reference for correctness checking."""
    h = jnp.concatenate([x, y], axis=1)
    (w1, b1), (w2, b2), (w3, b3), (wo, bo) = params
    h = jnp.maximum(h @ w1 + b1, 0.0)
    h = jnp.maximum(h @ w2 + b2, 0.0)
    h = jnp.maximum(h @ w3 + b3, 0.0)
    return h @ wo + bo


if __name__ == "__main__":
    obs_size = 16
    num_actions = 4
    hidden = (32, 32, 32)

    key = jax.random.PRNGKey(0)
    k_x, k_y, k1, k2, k3, k4 = jax.random.split(key, 6)

    params = (
        init_linear(k1, obs_size + num_actions, hidden[0]),
        init_linear(k2, hidden[0], hidden[1]),
        init_linear(k3, hidden[1], hidden[2]),
        # output layer: weight ~ U(-0.003, 0.003) as in the PyTorch __init__
        init_linear(k4, hidden[2], 1, w_range=0.003),
    )

    # --- small single-tile case ---
    batch = 8
    x = jax.random.normal(k_x, (batch, obs_size), jnp.float32)
    y = jax.random.normal(k_y, (batch, num_actions), jnp.float32)

    out = jax.block_until_ready(qnn_forward(x, y, params))
    ref = reference_forward(x, y, params)
    assert out.shape == (batch, 1)
    # bf16 hidden weights in the kernel vs f32 reference -> loosened tolerance.
    assert jnp.allclose(out, ref, atol=1e-2, rtol=1e-2), (
        f"max abs err {jnp.max(jnp.abs(out - ref))}")

    # --- multi-tile case with batch padding (exercises the grid path) ---
    batch2 = 20
    kx2, ky2 = jax.random.split(jax.random.PRNGKey(1))
    x2 = jax.random.normal(kx2, (batch2, obs_size), jnp.float32)
    y2 = jax.random.normal(ky2, (batch2, num_actions), jnp.float32)

    out2 = jax.block_until_ready(qnn_forward(x2, y2, params, block_b=8))
    ref2 = reference_forward(x2, y2, params)
    assert out2.shape == (batch2, 1)
    assert jnp.allclose(out2, ref2, atol=1e-2, rtol=1e-2), (
        f"max abs err {jnp.max(jnp.abs(out2 - ref2))}")

    print("KERNEL_OK")
</pallas_src>

<mosaic_0001>
module attributes {stable_mosaic.version = 11 : i64} {
  func.func @qnn_kernel(%arg0: i32, %arg1: memref<8x16xf32, #tpu.memory_space<vmem>>, %arg2: memref<8x4xf32, #tpu.memory_space<vmem>>, %arg3: memref<16x32xbf16, #tpu.memory_space<vmem>>, %arg4: memref<4x32xbf16, #tpu.memory_space<vmem>>, %arg5: memref<1x32xf32, #tpu.memory_space<vmem>>, %arg6: memref<32x32xbf16, #tpu.memory_space<vmem>>, %arg7: memref<1x32xf32, #tpu.memory_space<vmem>>, %arg8: memref<32x32xbf16, #tpu.memory_space<vmem>>, %arg9: memref<1x32xf32, #tpu.memory_space<vmem>>, %arg10: memref<32x128xf32, #tpu.memory_space<vmem>>, %arg11: memref<1x128xf32, #tpu.memory_space<vmem>>, %arg12: memref<8x128xf32, #tpu.memory_space<vmem>>) attributes {dimension_semantics = [#tpu.dimension_semantics<parallel>], iteration_bounds = array<i64: 1>, scalar_prefetch = 0 : i64, scratch_operands = 0 : i64, tpu.core_type = #tpu.core_type<tc>, window_params = [{transform_indices = @transform_0, window_bounds = array<i64: 8, 16>}, {transform_indices = @transform_1, window_bounds = array<i64: 8, 4>}, {pipeline_mode = #tpu.pipeline_mode<synchronous>, transform_indices = @transform_2, window_bounds = array<i64: 16, 32>}, {pipeline_mode = #tpu.pipeline_mode<synchronous>, transform_indices = @transform_3, window_bounds = array<i64: 4, 32>}, {pipeline_mode = #tpu.pipeline_mode<synchronous>, transform_indices = @transform_4, window_bounds = array<i64: 1, 32>}, {pipeline_mode = #tpu.pipeline_mode<synchronous>, transform_indices = @transform_5, window_bounds = array<i64: 32, 32>}, {pipeline_mode = #tpu.pipeline_mode<synchronous>, transform_indices = @transform_6, window_bounds = array<i64: 1, 32>}, {pipeline_mode = #tpu.pipeline_mode<synchronous>, transform_indices = @transform_7, window_bounds = array<i64: 32, 32>}, {pipeline_mode = #tpu.pipeline_mode<synchronous>, transform_indices = @transform_8, window_bounds = array<i64: 1, 32>}, {pipeline_mode = #tpu.pipeline_mode<synchronous>, transform_indices = @transform_9, window_bounds = array<i64: 32, 128>}, {pipeline_mode = #tpu.pipeline_mode<synchronous>, transform_indices = @transform_10, window_bounds = array<i64: 1, 128>}, {transform_indices = @transform_11, window_bounds = array<i64: 8, 128>}]} {
    %c0 = arith.constant 0 : index
    %c0_0 = arith.constant 0 : index
    %0 = vector.load %arg1[%c0, %c0_0] : memref<8x16xf32, #tpu.memory_space<vmem>>, vector<8x16xf32>
    %1 = arith.truncf %0 : vector<8x16xf32> to vector<8x16xbf16>
    %c0_1 = arith.constant 0 : index
    %c0_2 = arith.constant 0 : index
    %2 = vector.load %arg3[%c0_1, %c0_2] : memref<16x32xbf16, #tpu.memory_space<vmem>>, vector<16x32xbf16>
    %cst = arith.constant dense<0.000000e+00> : vector<8x32xf32>
    %3 = tpu.matmul %1, %2, %cst {dimension_numbers = #tpu.dot_dimension_numbers<[1], [0], [0], [1], [0, 0, 1, 1], [], []>} : vector<8x16xbf16>, vector<16x32xbf16>, vector<8x32xf32> -> vector<8x32xf32>
    %c0_3 = arith.constant 0 : index
    %c0_4 = arith.constant 0 : index
    %4 = vector.load %arg2[%c0_3, %c0_4] : memref<8x4xf32, #tpu.memory_space<vmem>>, vector<8x4xf32>
    %5 = arith.truncf %4 : vector<8x4xf32> to vector<8x4xbf16>
    %c0_5 = arith.constant 0 : index
    %c0_6 = arith.constant 0 : index
    %6 = vector.load %arg4[%c0_5, %c0_6] : memref<4x32xbf16, #tpu.memory_space<vmem>>, vector<4x32xbf16>
    %cst_7 = arith.constant dense<0.000000e+00> : vector<8x32xf32>
    %7 = tpu.matmul %5, %6, %cst_7 {dimension_numbers = #tpu.dot_dimension_numbers<[1], [0], [0], [1], [0, 0, 1, 1], [], []>} : vector<8x4xbf16>, vector<4x32xbf16>, vector<8x32xf32> -> vector<8x32xf32>
    %8 = arith.addf %3, %7 : vector<8x32xf32>
    %c0_8 = arith.constant 0 : index
    %c0_9 = arith.constant 0 : index
    %9 = vector.load %arg5[%c0_8, %c0_9] : memref<1x32xf32, #tpu.memory_space<vmem>>, vector<1x32xf32>
    %10 = vector.broadcast %9 : vector<1x32xf32> to vector<8x32xf32>
    %11 = arith.addf %8, %10 : vector<8x32xf32>
    %cst_10 = arith.constant 0.000000e+00 : f32
    %12 = vector.broadcast %cst_10 : f32 to vector<8x32xf32>
    %13 = arith.maximumf %11, %12 : vector<8x32xf32>
    %14 = arith.truncf %13 : vector<8x32xf32> to vector<8x32xbf16>
    %c0_11 = arith.constant 0 : index
    %c0_12 = arith.constant 0 : index
    %15 = vector.load %arg6[%c0_11, %c0_12] : memref<32x32xbf16, #tpu.memory_space<vmem>>, vector<32x32xbf16>
    %cst_13 = arith.constant dense<0.000000e+00> : vector<8x32xf32>
    %16 = tpu.matmul %14, %15, %cst_13 {dimension_numbers = #tpu.dot_dimension_numbers<[1], [0], [0], [1], [0, 0, 1, 1], [], []>} : vector<8x32xbf16>, vector<32x32xbf16>, vector<8x32xf32> -> vector<8x32xf32>
    %c0_14 = arith.constant 0 : index
    %c0_15 = arith.constant 0 : index
    %17 = vector.load %arg7[%c0_14, %c0_15] : memref<1x32xf32, #tpu.memory_space<vmem>>, vector<1x32xf32>
    %18 = vector.broadcast %17 : vector<1x32xf32> to vector<8x32xf32>
    %19 = arith.addf %16, %18 : vector<8x32xf32>
    %cst_16 = arith.constant 0.000000e+00 : f32
    %20 = vector.broadcast %cst_16 : f32 to vector<8x32xf32>
    %21 = arith.maximumf %19, %20 : vector<8x32xf32>
    %22 = arith.truncf %21 : vector<8x32xf32> to vector<8x32xbf16>
    %c0_17 = arith.constant 0 : index
    %c0_18 = arith.constant 0 : index
    %23 = vector.load %arg8[%c0_17, %c0_18] : memref<32x32xbf16, #tpu.memory_space<vmem>>, vector<32x32xbf16>
    %cst_19 = arith.constant dense<0.000000e+00> : vector<8x32xf32>
    %24 = tpu.matmul %22, %23, %cst_19 {dimension_numbers = #tpu.dot_dimension_numbers<[1], [0], [0], [1], [0, 0, 1, 1], [], []>} : vector<8x32xbf16>, vector<32x32xbf16>, vector<8x32xf32> -> vector<8x32xf32>
    %c0_20 = arith.constant 0 : index
    %c0_21 = arith.constant 0 : index
    %25 = vector.load %arg9[%c0_20, %c0_21] : memref<1x32xf32, #tpu.memory_space<vmem>>, vector<1x32xf32>
    %26 = vector.broadcast %25 : vector<1x32xf32> to vector<8x32xf32>
    %27 = arith.addf %24, %26 : vector<8x32xf32>
    %cst_22 = arith.constant 0.000000e+00 : f32
    %28 = vector.broadcast %cst_22 : f32 to vector<8x32xf32>
    %29 = arith.maximumf %27, %28 : vector<8x32xf32>
    %c0_23 = arith.constant 0 : index
    %c0_24 = arith.constant 0 : index
    %30 = vector.load %arg10[%c0_23, %c0_24] : memref<32x128xf32, #tpu.memory_space<vmem>>, vector<32x128xf32>
    %cst_25 = arith.constant dense<0.000000e+00> : vector<8x128xf32>
    %31 = tpu.matmul %29, %30, %cst_25 {dimension_numbers = #tpu.dot_dimension_numbers<[1], [0], [0], [1], [0, 0, 1, 1], [], []>} : vector<8x32xf32>, vector<32x128xf32>, vector<8x128xf32> -> vector<8x128xf32>
    %c0_26 = arith.constant 0 : index
    %c0_27 = arith.constant 0 : index
    %32 = vector.load %arg11[%c0_26, %c0_27] : memref<1x128xf32, #tpu.memory_space<vmem>>, vector<1x128xf32>
    %33 = vector.broadcast %32 : vector<1x128xf32> to vector<8x128xf32>
    %34 = arith.addf %31, %33 : vector<8x128xf32>
    %c0_28 = arith.constant 0 : index
    %c0_29 = arith.constant 0 : index
    %35 = vector.load %arg12[%c0_28, %c0_29] : memref<8x128xf32, #tpu.memory_space<vmem>>, vector<8x128xf32>
    tpu.vector_store %arg12[%c0_28, %c0_29], %34 {strides = array<i32>} : memref<8x128xf32, #tpu.memory_space<vmem>>, vector<8x128xf32>,
    return
  }
  func.func @transform_0(%arg0: i32) -> (i32, i32) {
    %c0_i32 = arith.constant 0 : i32
    %c0_i32_0 = arith.constant 0 : i32
    return %arg0, %c0_i32 : i32, i32
  }
  func.func @transform_1(%arg0: i32) -> (i32, i32) {
    %c0_i32 = arith.constant 0 : i32
    %c0_i32_0 = arith.constant 0 : i32
    return %arg0, %c0_i32 : i32, i32
  }
  func.func @transform_2(%arg0: i32) -> (i32, i32) {
    %c0_i32 = arith.constant 0 : i32
    %c0_i32_0 = arith.constant 0 : i32
    %c0_i32_1 = arith.constant 0 : i32
    return %c0_i32, %c0_i32_0 : i32, i32
  }
  func.func @transform_3(%arg0: i32) -> (i32, i32) {
    %c0_i32 = arith.constant 0 : i32
    %c0_i32_0 = arith.constant 0 : i32
    %c0_i32_1 = arith.constant 0 : i32
    return %c0_i32, %c0_i32_0 : i32, i32
  }
  func.func @transform_4(%arg0: i32) -> (i32, i32) {
    %c0_i32 = arith.constant 0 : i32
    %c0_i32_0 = arith.constant 0 : i32
    %c0_i32_1 = arith.constant 0 : i32
    return %c0_i32, %c0_i32_0 : i32, i32
  }
  func.func @transform_5(%arg0: i32) -> (i32, i32) {
    %c0_i32 = arith.constant 0 : i32
    %c0_i32_0 = arith.constant 0 : i32
    %c0_i32_1 = arith.constant 0 : i32
    return %c0_i32, %c0_i32_0 : i32, i32
  }
  func.func @transform_6(%arg0: i32) -> (i32, i32) {
    %c0_i32 = arith.constant 0 : i32
    %c0_i32_0 = arith.constant 0 : i32
    %c0_i32_1 = arith.constant 0 : i32
    return %c0_i32, %c0_i32_0 : i32, i32
  }
  func.func @transform_7(%arg0: i32) -> (i32, i32) {
    %c0_i32 = arith.constant 0 : i32
    %c0_i32_0 = arith.constant 0 : i32
    %c0_i32_1 = arith.constant 0 : i32
    return %c0_i32, %c0_i32_0 : i32, i32
  }
  func.func @transform_8(%arg0: i32) -> (i32, i32) {
    %c0_i32 = arith.constant 0 : i32
    %c0_i32_0 = arith.constant 0 : i32
    %c0_i32_1 = arith.constant 0 : i32
    return %c0_i32, %c0_i32_0 : i32, i32
  }
  func.func @transform_9(%arg0: i32) -> (i32, i32) {
    %c0_i32 = arith.constant 0 : i32
    %c0_i32_0 = arith.constant 0 : i32
    %c0_i32_1 = arith.constant 0 : i32
    return %c0_i32, %c0_i32_0 : i32, i32
  }
  func.func @transform_10(%arg0: i32) -> (i32, i32) {
    %c0_i32 = arith.constant 0 : i32
    %c0_i32_0 = arith.constant 0 : i32
    %c0_i32_1 = arith.constant 0 : i32
    return %c0_i32, %c0_i32_0 : i32, i32
  }
  func.func @transform_11(%arg0: i32) -> (i32, i32) {
    %c0_i32 = arith.constant 0 : i32
    %c0_i32_0 = arith.constant 0 : i32
    return %arg0, %c0_i32 : i32, i32
  }
}

</mosaic_0001>

<llo_original>
// kernel: qnn_forward.1
$region0: #{qnn_forward.1}
  #allocation0 [shape = 'u32[]', space=smem, size = 0x4, offset = 0x4, fixed_abs, tag = 'smem constant byte address 0x4 - core index']
  #allocation1 [shape = 'u32[144,128]{1,0:T(1,128)}', space=vmem, size = 0x12000, scoped, tag = 'internal scratch']
  %s0 = inlined_call_operand.vmem [shape: f32[8,16], index: 0, kind: input, shape index: {}]
  %s1 = inlined_call_operand.vmem [shape: f32[8,4], index: 1, kind: input, shape index: {}]
  %s2 = inlined_call_operand.vmem [shape: bf16[16,32], index: 2, kind: input, shape index: {}]
  %s3 = inlined_call_operand.vmem [shape: bf16[4,32], index: 3, kind: input, shape index: {}]
  %s4 = inlined_call_operand.vmem [shape: f32[1,32], index: 4, kind: input, shape index: {}]
  %s5 = inlined_call_operand.vmem [shape: bf16[32,32], index: 5, kind: input, shape index: {}]
  %s6 = inlined_call_operand.vmem [shape: f32[1,32], index: 6, kind: input, shape index: {}]
  %s7 = inlined_call_operand.vmem [shape: bf16[32,32], index: 7, kind: input, shape index: {}]
  %s8 = inlined_call_operand.vmem [shape: f32[1,32], index: 8, kind: input, shape index: {}]
  %s9 = inlined_call_operand.vmem [shape: f32[32,128], index: 9, kind: input, shape index: {}]
  %s10 = inlined_call_operand.vmem [shape: f32[1,128], index: 10, kind: input, shape index: {}]
  %s11 = inlined_call_operand.vmem [shape: f32[8,128], index: 11, kind: output, shape index: {}]
  %s12 = sld [smem:[#allocation0]]
  $region54: #{qnn_forward.1} parent=0
    _
  %s14 = ssub.s32 1, %s12
  %s15 = scalar_select 0, %s14, %s12
  // Predicated region
  $region2: #{qnn_forward.1} parent=0 // pred_check
    _
  $region3: #{qnn_forward.1} parent=0 // pred_check_branch
    %17 = sbr.rel (0) target = $region5
  $region4: #{qnn_forward.1} parent=0 // pred_region
    _
  $region5: #{qnn_forward.1} parent=0 // pred_fallthru
    _
  // Predicated region
  $region6: #{qnn_forward.1} parent=0 // pred_check
    _
  $region7: #{qnn_forward.1} parent=0 // pred_check_branch
    %19 = sbr.rel (0) target = $region9
  $region8: #{qnn_forward.1} parent=0 // pred_region
    _
  $region9: #{qnn_forward.1} parent=0 // pred_fallthru
    _
  // Predicated region
  $region10: #{qnn_forward.1} parent=0 // pred_check
    _
  $region11: #{qnn_forward.1} parent=0 // pred_check_branch
    %21 = sbr.rel (0) target = $region13
  $region12: #{qnn_forward.1} parent=0 // pred_region
    _
  $region13: #{qnn_forward.1} parent=0 // pred_fallthru
    _
  // Predicated region
  $region14: #{qnn_forward.1} parent=0 // pred_check
    _
  $region15: #{qnn_forward.1} parent=0 // pred_check_branch
    %23 = sbr.rel (0) target = $region17
  $region16: #{qnn_forward.1} parent=0 // pred_region
    _
  $region17: #{qnn_forward.1} parent=0 // pred_fallthru
    _
  // Predicated region
  $region18: #{qnn_forward.1} parent=0 // pred_check
    _
  $region19: #{qnn_forward.1} parent=0 // pred_check_branch
    %25 = sbr.rel (0) target = $region21
  $region20: #{qnn_forward.1} parent=0 // pred_region
    _
  $region21: #{qnn_forward.1} parent=0 // pred_fallthru
    _
  // Predicated region
  $region22: #{qnn_forward.1} parent=0 // pred_check
    _
  $region23: #{qnn_forward.1} parent=0 // pred_check_branch
    %27 = sbr.rel (0) target = $region25
  $region24: #{qnn_forward.1} parent=0 // pred_region
    _
  $region25: #{qnn_forward.1} parent=0 // pred_fallthru
    _
  // Predicated region
  $region26: #{qnn_forward.1} parent=0 // pred_check
    _
  $region27: #{qnn_forward.1} parent=0 // pred_check_branch
    %29 = sbr.rel (0) target = $region29
  $region28: #{qnn_forward.1} parent=0 // pred_region
    _
  $region29: #{qnn_forward.1} parent=0 // pred_fallthru
    _
  // Predicated region
  $region30: #{qnn_forward.1} parent=0 // pred_check
    _
  $region31: #{qnn_forward.1} parent=0 // pred_check_branch
    %31 = sbr.rel (0) target = $region33
  $region32: #{qnn_forward.1} parent=0 // pred_region
    _
  $region33: #{qnn_forward.1} parent=0 // pred_fallthru
    _
  // Predicated region
  $region34: #{qnn_forward.1} parent=0 // pred_check
    _
  $region35: #{qnn_forward.1} parent=0 // pred_check_branch
    %33 = sbr.rel (0) target = $region37
  $region36: #{qnn_forward.1} parent=0 // pred_region
    _
  $region37: #{qnn_forward.1} parent=0 // pred_fallthru
    _
  // Predicated region
  $region38: #{qnn_forward.1} parent=0 // pred_check
    _
  $region39: #{qnn_forward.1} parent=0 // pred_check_branch
    %35 = sbr.rel (0) target = $region41
  $region40: #{qnn_forward.1} parent=0 // pred_region
    _
  $region41: #{qnn_forward.1} parent=0 // pred_fallthru
    _
  // Predicated region
  $region42: #{qnn_forward.1} parent=0 // pred_check
    _
  $region43: #{qnn_forward.1} parent=0 // pred_check_branch
    %37 = sbr.rel (0) target = $region45
  $region44: #{qnn_forward.1} parent=0 // pred_region
    _
  $region45: #{qnn_forward.1} parent=0 // pred_fallthru
    _
  %v39 = vld [vmem:[%s0] sm:$0xff]
  %v40 = vpack.c.bf16 %v39, %v39
  %v41 = vld [vmem:[%s2] sm:$0xf]
  %v42 = vld [vmem:[%s2 + $0x4] sm:$0xf]
  %v43 = vld [vmem:[%s1] sm:$0xff]
  %v44 = vpack.c.bf16 %v43, %v43
  %v45 = vld [vmem:[%s3] sm:$0x3]
  %vm46 = vcmask 31744
  %v48 = vsel %vm46, %v44, 0
  %vm50 = vcmask 1041408
  %v52 = vsel %vm50, %v45, 0
  %54 = vmatprep.subr.bf16.mxu0 0
  %55 = vmatpush1.bf16.msra.mxu0 0
  %56 = vmatprep.subr.bf16.mxu0 0
  %57 = vmatpush1.bf16.msra.mxu0 0
  %58 = vmatprep.subr.bf16.mxu0 0
  %59 = vmatpush1.bf16.msra.mxu0 0
  %60 = vmatprep.subr.bf16.mxu0 0
  %61 = vmatpush1.bf16.msra.mxu0 0
  %62 = vmatprep.subr.bf16.mxu0 0
  %63 = vmatpush1.bf16.msra.mxu0 0
  %64 = vmatprep.subr.bf16.mxu0 0
  %65 = vmatpush1.bf16.msra.mxu0 0
  %66 = vmatprep.subr.bf16.mxu0 0
  %67 = vmatpush1.bf16.msra.mxu0 0
  %68 = vmatprep.subr.bf16.mxu0 0
  %69 = vmatpush1.bf16.msra.mxu0 %v52
  %70 = vmatprep.subr.bf16.mxu0 0
  %71 = vmatpush2.bf16.msra.mxu0 0
  %72 = vmatprep.subr.bf16.mxu0 0
  %73 = vmatpush2.bf16.msra.mxu0 0
  %74 = vmatprep.subr.bf16.mxu0 0
  %75 = vmatpush2.bf16.msra.mxu0 0
  %76 = vmatprep.subr.bf16.mxu0 0
  %77 = vmatpush2.bf16.msra.mxu0 0
  %78 = vmatprep.subr.bf16.mxu0 0
  %79 = vmatpush2.bf16.msra.mxu0 0
  %80 = vmatprep.subr.bf16.mxu0 0
  %81 = vmatpush2.bf16.msra.mxu0 0
  %82 = vmatprep.subr.bf16.mxu0 0
  %83 = vmatpush2.bf16.msra.mxu0 0
  %84 = vmatprep.subr.bf16.mxu0 0
  %85 = vmatpush2.bf16.msra.mxu0 0
  %86 = vmatprep.mubr.bf16.mxu0 0
  %87 = vmatmul.mubr.bf16.gmra.mxu0 %v48
  %v88 = vpop.f32.mrf.mxu0
  %v89 = vadd.f32 0.0, %v88
  %v90 = vpop.f32.mrf.mxu0
  %v91 = vpop.f32.mrf.mxu0
  %v92 = vpop.f32.mrf.mxu0
  %93 = vdwg.mxu0
  %v96 = vunpack.c.l.b16 %v41
  %v97 = vunpack.c.l.b16 %v42
  %v98 = vpack.c.b16 %v97, %v96
  %vm100 = vcmask 130048
  %v102 = vsel %vm100, %v40, 0
  %104 = vmatprep.subr.bf16.mxu0 0
  %105 = vmatpush1.bf16.msra.mxu0 0
  %106 = vmatprep.subr.bf16.mxu0 0
  %107 = vmatpush1.bf16.msra.mxu0 0
  %108 = vmatprep.subr.bf16.mxu0 0
  %109 = vmatpush1.bf16.msra.mxu0 0
  %110 = vmatprep.subr.bf16.mxu0 0
  %111 = vmatpush1.bf16.msra.mxu0 0
  %112 = vmatprep.subr.bf16.mxu0 0
  %113 = vmatpush1.bf16.msra.mxu0 0
  %114 = vmatprep.subr.bf16.mxu0 0
  %115 = vmatpush1.bf16.msra.mxu0 0
  %116 = vmatprep.subr.bf16.mxu0 0
  %117 = vmatpush1.bf16.msra.mxu0 0
  %118 = vmatprep.subr.bf16.mxu0 0
  %119 = vmatpush1.bf16.msra.mxu0 %v98
  %120 = vmatprep.subr.bf16.mxu0 0
  %121 = vmatpush2.bf16.msra.mxu0 0
  %122 = vmatprep.subr.bf16.mxu0 0
  %123 = vmatpush2.bf16.msra.mxu0 0
  %124 = vmatprep.subr.bf16.mxu0 0
  %125 = vmatpush2.bf16.msra.mxu0 0
  %126 = vmatprep.subr.bf16.mxu0 0
  %127 = vmatpush2.bf16.msra.mxu0 0
  %128 = vmatprep.subr.bf16.mxu0 0
  %129 = vmatpush2.bf16.msra.mxu0 0
  %130 = vmatprep.subr.bf16.mxu0 0
  %131 = vmatpush2.bf16.msra.mxu0 0
  %132 = vmatprep.subr.bf16.mxu0 0
  %133 = vmatpush2.bf16.msra.mxu0 0
  %134 = vmatprep.subr.bf16.mxu0 0
  %135 = vmatpush2.bf16.msra.mxu0 0
  %136 = vmatprep.mubr.bf16.mxu0 0
  %137 = vmatmul.mubr.bf16.gmra.mxu0 %v102
  %v138 = vpop.f32.mrf.mxu0
  %v139 = vadd.f32 %v89, %v138
  %v140 = vpop.f32.mrf.mxu0
  %v141 = vpop.f32.mrf.mxu0
  %v142 = vpop.f32.mrf.mxu0
  %143 = vdwg.mxu0
  %v144 = vld [vmem:[%s4] sm:$0x1]
  %v146 = vlaneseq
  %v147 = vshrl.u32 %v146, 7
  %v148 = vsub.s32 0, %v147
  %v149 = vrot.slane %v144, %v148
  %v151 = vadd.f32 %v139, %v149
  %v152 = vmax.f32 %v151, 0.0
  %v153 = vpack.c.bf16 %v152, %v152
  %v154 = vld [vmem:[%s5] sm:$0xf]
  %v155 = vld [vmem:[%s5 + $0x4] sm:$0xf]
  %v156 = vld [vmem:[%s5 + $0x8] sm:$0xf]
  %v157 = vld [vmem:[%s5 + $0xc] sm:$0xf]
  %v158 = vld [vmem:[%s6] sm:$0x1]
  %v160 = vlaneseq
  %v161 = vshrl.u32 %v160, 7
  %v162 = vsub.s32 0, %v161
  %v163 = vrot.slane %v158, %v162
  %v169 = vunpack.c.l.b16 %v154
  %v170 = vunpack.c.l.b16 %v155
  %v171 = vunpack.c.l.b16 %v156
  %v172 = vunpack.c.l.b16 %v157
  %v173 = vpack.c.b16 %v170, %v169
  %v174 = vpack.c.b16 %v172, %v171
  %vm177 = vcmask 261120
  %v179 = vsel %vm177, %v153, 0
  %181 = vmatprep.subr.bf16.mxu0 0
  %182 = vmatpush1.bf16.msra.mxu0 0
  %183 = vmatprep.subr.bf16.mxu0 0
  %184 = vmatpush1.bf16.msra.mxu0 0
  %185 = vmatprep.subr.bf16.mxu0 0
  %186 = vmatpush1.bf16.msra.mxu0 0
  %187 = vmatprep.subr.bf16.mxu0 0
  %188 = vmatpush1.bf16.msra.mxu0 0
  %189 = vmatprep.subr.bf16.mxu0 0
  %190 = vmatpush1.bf16.msra.mxu0 0
  %191 = vmatprep.subr.bf16.mxu0 0
  %192 = vmatpush1.bf16.msra.mxu0 0
  %193 = vmatprep.subr.bf16.mxu0 0
  %194 = vmatpush1.bf16.msra.mxu0 %v174
  %195 = vmatprep.subr.bf16.mxu0 0
  %196 = vmatpush1.bf16.msra.mxu0 %v173
  %197 = vmatprep.subr.bf16.mxu0 0
  %198 = vmatpush2.bf16.msra.mxu0 0
  %199 = vmatprep.subr.bf16.mxu0 0
  %200 = vmatpush2.bf16.msra.mxu0 0
  %201 = vmatprep.subr.bf16.mxu0 0
  %202 = vmatpush2.bf16.msra.mxu0 0
  %203 = vmatprep.subr.bf16.mxu0 0
  %204 = vmatpush2.bf16.msra.mxu0 0
  %205 = vmatprep.subr.bf16.mxu0 0
  %206 = vmatpush2.bf16.msra.mxu0 0
  %207 = vmatprep.subr.bf16.mxu0 0
  %208 = vmatpush2.bf16.msra.mxu0 0
  %209 = vmatprep.subr.bf16.mxu0 0
  %210 = vmatpush2.bf16.msra.mxu0 0
  %211 = vmatprep.subr.bf16.mxu0 0
  %212 = vmatpush2.bf16.msra.mxu0 0
  %213 = vmatprep.mubr.bf16.mxu0 0
  %214 = vmatmul.mubr.bf16.gmra.mxu0 %v179
  %v215 = vpop.f32.mrf.mxu0
  %v216 = vadd.f32 %v163, %v215
  %v217 = vpop.f32.mrf.mxu0
  %v218 = vpop.f32.mrf.mxu0
  %v219 = vpop.f32.mrf.mxu0
  %220 = vdwg.mxu0
  %v221 = vmax.f32 %v216, 0.0
  %v222 = vpack.c.bf16 %v221, %v221
  %v223 = vld [vmem:[%s7] sm:$0xf]
  %v224 = vld [vmem:[%s7 + $0x4] sm:$0xf]
  %v225 = vld [vmem:[%s7 + $0x8] sm:$0xf]
  %v226 = vld [vmem:[%s7 + $0xc] sm:$0xf]
  %v227 = vld [vmem:[%s8] sm:$0x1]
  %v229 = vlaneseq
  %v230 = vshrl.u32 %v229, 7
  %v231 = vsub.s32 0, %v230
  %v232 = vrot.slane %v227, %v231
  %v238 = vunpack.c.l.b16 %v223
  %v239 = vunpack.c.l.b16 %v224
  %v240 = vunpack.c.l.b16 %v225
  %v241 = vunpack.c.l.b16 %v226
  %v242 = vpack.c.b16 %v239, %v238
  %v243 = vpack.c.b16 %v241, %v240
  %v247 = vsel %vm177, %v222, 0
  %249 = vmatprep.subr.bf16.mxu0 0
  %250 = vmatpush1.bf16.msra.mxu0 0
  %251 = vmatprep.subr.bf16.mxu0 0
  %252 = vmatpush1.bf16.msra.mxu0 0
  %253 = vmatprep.subr.bf16.mxu0 0
  %254 = vmatpush1.bf16.msra.mxu0 0
  %255 = vmatprep.subr.bf16.mxu0 0
  %256 = vmatpush1.bf16.msra.mxu0 0
  %257 = vmatprep.subr.bf16.mxu0 0
  %258 = vmatpush1.bf16.msra.mxu0 0
  %259 = vmatprep.subr.bf16.mxu0 0
  %260 = vmatpush1.bf16.msra.mxu0 0
  %261 = vmatprep.subr.bf16.mxu0 0
  %262 = vmatpush1.bf16.msra.mxu0 %v243
  %263 = vmatprep.subr.bf16.mxu0 0
  %264 = vmatpush1.bf16.msra.mxu0 %v242
  %265 = vmatprep.subr.bf16.mxu0 0
  %266 = vmatpush2.bf16.msra.mxu0 0
  %267 = vmatprep.subr.bf16.mxu0 0
  %268 = vmatpush2.bf16.msra.mxu0 0
  %269 = vmatprep.subr.bf16.mxu0 0
  %270 = vmatpush2.bf16.msra.mxu0 0
  %271 = vmatprep.subr.bf16.mxu0 0
  %272 = vmatpush2.bf16.msra.mxu0 0
  %273 = vmatprep.subr.bf16.mxu0 0
  %274 = vmatpush2.bf16.msra.mxu0 0
  %275 = vmatprep.subr.bf16.mxu0 0
  %276 = vmatpush2.bf16.msra.mxu0 0
  %277 = vmatprep.subr.bf16.mxu0 0
  %278 = vmatpush2.bf16.msra.mxu0 0
  %279 = vmatprep.subr.bf16.mxu0 0
  %280 = vmatpush2.bf16.msra.mxu0 0
  %281 = vmatprep.mubr.bf16.mxu0 0
  %282 = vmatmul.mubr.bf16.gmra.mxu0 %v247
  %v283 = vpop.f32.mrf.mxu0
  %v284 = vadd.f32 %v232, %v283
  %v285 = vpop.f32.mrf.mxu0
  %v286 = vpop.f32.mrf.mxu0
  %v287 = vpop.f32.mrf.mxu0
  %288 = vdwg.mxu0
  %v289 = vmax.f32 %v284, 0.0
  %v290 = vld [vmem:[%s9] sm:$0xff]
  %v291 = vld [vmem:[%s9 + $0x8] sm:$0xff]
  %v292 = vld [vmem:[%s9 + $0x10] sm:$0xff]
  %v293 = vld [vmem:[%s9 + $0x18] sm:$0xff]
  %v294 = vld [vmem:[%s10] sm:$0x1]
  %v296 = vlaneseq
  %v297 = vshrl.u32 %v296, 7
  %v298 = vsub.s32 0, %v297
  %v299 = vrot.slane %v294, %v298
  %v302 = vsel %vm177, %v289, 0
  %304 = vmatprep.subr.mxu0 0.0
  %305 = vmatpush1.msra.mxu0 0.0
  %306 = vmatprep.subr.mxu0 0.0
  %307 = vmatpush1.msra.mxu0 0.0
  %308 = vmatprep.subr.mxu0 0.0
  %309 = vmatpush1.msra.mxu0 0.0
  %310 = vmatprep.subr.mxu0 0.0
  %311 = vmatpush1.msra.mxu0 0.0
  %312 = vmatprep.subr.mxu0 0.0
  %313 = vmatpush1.msra.mxu0 0.0
  %314 = vmatprep.subr.mxu0 0.0
  %315 = vmatpush1.msra.mxu0 0.0
  %316 = vmatprep.subr.mxu0 0.0
  %317 = vmatpush1.msra.mxu0 0.0
  %318 = vmatprep.subr.mxu0 0.0
  %319 = vmatpush1.msra.mxu0 0.0
  %320 = vmatprep.subr.mxu0 0.0
  %321 = vmatpush1.msra.mxu0 0.0
  %322 = vmatprep.subr.mxu0 0.0
  %323 = vmatpush1.msra.mxu0 0.0
  %324 = vmatprep.subr.mxu0 0.0
  %325 = vmatpush1.msra.mxu0 0.0
  %326 = vmatprep.subr.mxu0 0.0
  %327 = vmatpush1.msra.mxu0 0.0
  %328 = vmatprep.subr.mxu0 0.0
  %329 = vmatpush1.msra.mxu0 %v293
  %330 = vmatprep.subr.mxu0 0.0
  %331 = vmatpush1.msra.mxu0 %v292
  %332 = vmatprep.subr.mxu0 0.0
  %333 = vmatpush1.msra.mxu0 %v291
  %334 = vmatprep.subr.mxu0 0.0
  %335 = vmatpush1.msra.mxu0 %v290
  %336 = vmatprep.subr.mxu0 0.0
  %337 = vmatpush2.msra.mxu0 0.0
  %338 = vmatprep.subr.mxu0 0.0
  %339 = vmatpush2.msra.mxu0 0.0
  %340 = vmatprep.subr.mxu0 0.0
  %341 = vmatpush2.msra.mxu0 0.0
  %342 = vmatprep.subr.mxu0 0.0
  %343 = vmatpush2.msra.mxu0 0.0
  %344 = vmatprep.subr.mxu0 0.0
  %345 = vmatpush2.msra.mxu0 0.0
  %346 = vmatprep.subr.mxu0 0.0
  %347 = vmatpush2.msra.mxu0 0.0
  %348 = vmatprep.subr.mxu0 0.0
  %349 = vmatpush2.msra.mxu0 0.0
  %350 = vmatprep.subr.mxu0 0.0
  %351 = vmatpush2.msra.mxu0 0.0
  %352 = vmatprep.subr.mxu0 0.0
  %353 = vmatpush2.msra.mxu0 0.0
  %354 = vmatprep.subr.mxu0 0.0
  %355 = vmatpush2.msra.mxu0 0.0
  %356 = vmatprep.subr.mxu0 0.0
  %357 = vmatpush2.msra.mxu0 0.0
  %358 = vmatprep.subr.mxu0 0.0
  %359 = vmatpush2.msra.mxu0 0.0
  %360 = vmatprep.subr.mxu0 0.0
  %361 = vmatpush2.msra.mxu0 0.0
  %362 = vmatprep.subr.mxu0 0.0
  %363 = vmatpush2.msra.mxu0 0.0
  %364 = vmatprep.subr.mxu0 0.0
  %365 = vmatpush2.msra.mxu0 0.0
  %366 = vmatprep.subr.mxu0 0.0
  %367 = vmatpush2.msra.mxu0 0.0
  %368 = vmatprep.mubr.f32.mxu0 0.0
  %369 = vmatmul.mubr.f32.gmra.mxu0 %v302
  %v370 = vpop.f32.mrf.mxu0
  %v371 = vadd.f32 %v299, %v370
  %v372 = vpop.f32.mrf.mxu0
  %373 = vdwg.mxu0
  %374 = vst [vmem:[%s11] sm:$0xff] %v371
  // Predicated region
  $region46: #{qnn_forward.1} parent=0 // pred_check
    _
  $region47: #{qnn_forward.1} parent=0 // pred_check_branch
    %376 = sbr.rel (0) target = $region49
  $region48: #{qnn_forward.1} parent=0 // pred_region
    _
  $region49: #{qnn_forward.1} parent=0 // pred_fallthru
    _
  // Predicated region
  $region50: #{qnn_forward.1} parent=0 // pred_check
    _
  $region51: #{qnn_forward.1} parent=0 // pred_check_branch
    %378 = sbr.rel (0) target = $region53
  $region52: #{qnn_forward.1} parent=0 // pred_region
    _
  $region53: #{qnn_forward.1} parent=0 // pred_fallthru
    _

</llo_original>
